<compile_context>
chip_gen: v5e
topology: v5e:2x2
jax: 0.10.0
libtpu: 0.0.40
codegen_flags: <defaults>
</compile_context>

<pallas_src>
import jax
import jax.numpy as jnp
from jax import lax
from jax.experimental import pallas as pl
from jax.experimental.pallas import tpu as pltpu

EPS = 1e-5
LANE = 128
SUBLANE = 8


# ------------------------------ small helpers ------------------------------ #
def _round_up(x, m):
    return ((x + m - 1) // m) * m


def _pad_to(x, shape):
    pads = [(0, s - d) for d, s in zip(x.shape, shape)]
    if all(p == (0, 0) for p in pads):
        return x
    return jnp.pad(x, pads)


def _vmem_limit(*elem_counts):
    # f32 blocks, double-buffered, plus headroom; clamp to a safe range for
    # v5e/v6e (128 MiB) and v7x (64 MiB physical).
    need = 2 * 4 * sum(elem_counts)
    return int(min(max(need + (4 << 20), 16 << 20), 48 << 20))


def _pick_tiling(m, target=512):
    ntiles = max(1, -(-m // target))
    tm = _round_up(-(-m // ntiles), SUBLANE)
    return tm, tm * ntiles


# ------------------------------ Pallas kernels ------------------------------ #
def _conv_stats_kernel(taps_ref, w_ref, z_ref, ps_ref, pq_ref):
    # One big MXU matmul per M-tile (contraction depth = K*Cin, padded to 128).
    z = jnp.dot(taps_ref[...], w_ref[...], preferred_element_type=jnp.float32)
    z_ref[...] = z
    tm, cp = z.shape
    # Per-tile BN partials, reduced to an (8, Cp) slab (layout-preserving
    # sublane-group sum; zero-padded rows contribute nothing).
    zr = z.reshape(tm // SUBLANE, SUBLANE, cp)
    ps_ref[0] = jnp.sum(zr, axis=0)
    pq_ref[0] = jnp.sum(zr * zr, axis=0)


def _bn_relu_kernel(z_ref, sc_ref, sh_ref, out_ref):
    out_ref[...] = jnp.maximum(z_ref[...] * sc_ref[...] + sh_ref[...], 0.0)


def _bn_add_relu_kernel(z_ref, sc_ref, sh_ref, rz_ref, rsc_ref, rsh_ref, out_ref):
    y = z_ref[...] * sc_ref[...] + sh_ref[...]
    y = y + rz_ref[...] * rsc_ref[...] + rsh_ref[...]
    out_ref[...] = jnp.maximum(y, 0.0)


# ----------------------------- pallas_call wrappers ------------------------- #
def conv_stats(taps, w_mat, tm, mp, cp):
    """taps (M, Kc) @ w (Kc, Cout) -> z (Mp, Cp) + per-tile sum / sumsq."""
    m, kc = taps.shape
    kp = _round_up(kc, LANE)
    ntiles = mp // tm
    taps_p = _pad_to(taps.astype(jnp.float32), (mp, kp))
    w_p = _pad_to(w_mat.astype(jnp.float32), (kp, cp))

    z, ps, pq = pl.pallas_call(
        _conv_stats_kernel,
        out_shape=(
            jax.ShapeDtypeStruct((mp, cp), jnp.float32),
            jax.ShapeDtypeStruct((ntiles, SUBLANE, cp), jnp.float32),
            jax.ShapeDtypeStruct((ntiles, SUBLANE, cp), jnp.float32),
        ),
        grid_spec=pltpu.PrefetchScalarGridSpec(
            num_scalar_prefetch=0,
            grid=(ntiles,),
            in_specs=[
                pl.BlockSpec((tm, kp), lambda i: (i, 0)),      # tap tile
                pl.BlockSpec((kp, cp), lambda i: (0, 0)),      # folded weights
            ],
            out_specs=[
                pl.BlockSpec((tm, cp), lambda i: (i, 0)),           # conv out
                pl.BlockSpec((1, SUBLANE, cp), lambda i: (i, 0, 0)),  # sum
                pl.BlockSpec((1, SUBLANE, cp), lambda i: (i, 0, 0)),  # sumsq
            ],
        ),
        compiler_params=pltpu.CompilerParams(
            dimension_semantics=("parallel",),
            vmem_limit_bytes=_vmem_limit(tm * kp, kp * cp, tm * cp,
                                         2 * SUBLANE * cp),
        ),
    )(taps_p, w_p)

    s = jnp.sum(ps, axis=(0, 1))   # (Cp,) — pads contribute exactly 0
    q = jnp.sum(pq, axis=(0, 1))
    return z, s, q


def _bn_scale_shift(s, q, count, gamma, beta, cp):
    """Fold batch statistics into a per-channel affine (scale, shift)."""
    g = _pad_to(gamma.astype(jnp.float32), (cp,))
    b = _pad_to(beta.astype(jnp.float32), (cp,))
    mean = s / count
    var = jnp.maximum(q / count - mean * mean, 0.0)
    scale = g * lax.rsqrt(var + EPS)
    shift = b - mean * scale
    return scale.reshape(1, cp), shift.reshape(1, cp)


def bn_relu(z, scale, shift, tm):
    mp, cp = z.shape
    ntiles = mp // tm
    return pl.pallas_call(
        _bn_relu_kernel,
        out_shape=jax.ShapeDtypeStruct((mp, cp), jnp.float32),
        grid_spec=pltpu.PrefetchScalarGridSpec(
            num_scalar_prefetch=0,
            grid=(ntiles,),
            in_specs=[
                pl.BlockSpec((tm, cp), lambda i: (i, 0)),
                pl.BlockSpec((1, cp), lambda i: (0, 0)),
                pl.BlockSpec((1, cp), lambda i: (0, 0)),
            ],
            out_specs=pl.BlockSpec((tm, cp), lambda i: (i, 0)),
        ),
        compiler_params=pltpu.CompilerParams(
            dimension_semantics=("parallel",),
            vmem_limit_bytes=_vmem_limit(2 * tm * cp, 2 * cp),
        ),
    )(z, scale, shift)


def bn_add_relu(z, scale, shift, rz, rscale, rshift, tm):
    mp, cp = z.shape
    ntiles = mp // tm
    return pl.pallas_call(
        _bn_add_relu_kernel,
        out_shape=jax.ShapeDtypeStruct((mp, cp), jnp.float32),
        grid_spec=pltpu.PrefetchScalarGridSpec(
            num_scalar_prefetch=0,
            grid=(ntiles,),
            in_specs=[
                pl.BlockSpec((tm, cp), lambda i: (i, 0)),   # conv2 out
                pl.BlockSpec((1, cp), lambda i: (0, 0)),    # bn2 scale
                pl.BlockSpec((1, cp), lambda i: (0, 0)),    # bn2 shift
                pl.BlockSpec((tm, cp), lambda i: (i, 0)),   # shortcut pre-BN
                pl.BlockSpec((1, cp), lambda i: (0, 0)),    # shortcut scale
                pl.BlockSpec((1, cp), lambda i: (0, 0)),    # shortcut shift
            ],
            out_specs=pl.BlockSpec((tm, cp), lambda i: (i, 0)),
        ),
        compiler_params=pltpu.CompilerParams(
            dimension_semantics=("parallel",),
            vmem_limit_bytes=_vmem_limit(3 * tm * cp, 4 * cp),
        ),
    )(z, scale, shift, rz, rscale, rshift)


# -------------------------------- JAX glue ---------------------------------- #
def extract_taps(x_nhwc, ksize, stride, padding):
    """im2col folded along the tap axis -> (M, ksize*ksize*C)."""
    n, h, w, c = x_nhwc.shape
    ho = (h + 2 * padding - ksize) // stride + 1
    wo = (w + 2 * padding - ksize) // stride + 1
    xp = jnp.pad(x_nhwc, ((0, 0), (padding, padding), (padding, padding), (0, 0)))
    cols = []
    for kh in range(ksize):
        for kw in range(ksize):
            patch = xp[:, kh:kh + stride * ho:stride, kw:kw + stride * wo:stride, :]
            cols.append(patch.reshape(n * ho * wo, c))
    return jnp.concatenate(cols, axis=1), (n, ho, wo)


def _w_to_mat(w_torch):
    """(Cout, Cin, kh, kw) -> (kh*kw*Cin, Cout), matching the tap column order."""
    cout, cin, kh, kw = w_torch.shape
    return jnp.transpose(w_torch, (2, 3, 1, 0)).reshape(kh * kw * cin, cout)


def init_basic_block(key, in_c, out_c, stride):
    ks = jax.random.split(key, 6)
    p = {
        "w1": jax.random.normal(ks[0], (out_c, in_c, 3, 3), jnp.float32) * 0.1,
        "b1": jax.random.normal(ks[1], (out_c,), jnp.float32) * 0.1,
        "g1": jnp.ones((out_c,), jnp.float32),
        "be1": jnp.zeros((out_c,), jnp.float32),
        "w2": jax.random.normal(ks[2], (out_c, out_c, 3, 3), jnp.float32) * 0.1,
        "b2": jax.random.normal(ks[3], (out_c,), jnp.float32) * 0.1,
        "g2": jnp.ones((out_c,), jnp.float32),
        "be2": jnp.zeros((out_c,), jnp.float32),
    }
    if stride != 1 or in_c != out_c:
        p["wsc"] = jax.random.normal(ks[4], (out_c, in_c, 1, 1), jnp.float32) * 0.1
        p["bsc"] = jax.random.normal(ks[5], (out_c,), jnp.float32) * 0.1
        p["gsc"] = jnp.ones((out_c,), jnp.float32)
        p["besc"] = jnp.zeros((out_c,), jnp.float32)
    return p


def basic_block_forward(x_nchw, params, stride):
    x = jnp.transpose(x_nchw, (0, 2, 3, 1)).astype(jnp.float32)   # NCHW -> NHWC
    n, h, w, cin = x.shape
    cout = params["w1"].shape[0]
    cp = _round_up(cout, LANE)

    # conv1 (+ BN batch-stat partials), then fused normalize + ReLU
    taps1, (_, ho, wo) = extract_taps(x, 3, stride, 1)
    m = n * ho * wo
    tm, mp = _pick_tiling(m)
    z1, s1, q1 = conv_stats(taps1, _w_to_mat(params["w1"]), tm, mp, cp)
    sc1, sh1 = _bn_scale_shift(s1, q1, float(m), params["g1"], params["be1"], cp)
    y1 = bn_relu(z1, sc1, sh1, tm)

    # conv2 taps from the (sliced, unpadded) conv1 output image
    y1_img = y1[:m, :cout].reshape(n, ho, wo, cout)
    taps2, _ = extract_taps(y1_img, 3, 1, 1)
    z2, s2, q2 = conv_stats(taps2, _w_to_mat(params["w2"]), tm, mp, cp)
    sc2, sh2 = _bn_scale_shift(s2, q2, float(m), params["g2"], params["be2"], cp)

    # shortcut branch (1x1 conv + BN, or identity)
    if stride != 1 or cin != cout:
        taps_sc = x[:, ::stride, ::stride, :].reshape(m, cin)
        zsc, ssc, qsc = conv_stats(taps_sc, _w_to_mat(params["wsc"]), tm, mp, cp)
        scs, shs = _bn_scale_shift(ssc, qsc, float(m), params["gsc"],
                                   params["besc"], cp)
    else:
        zsc = _pad_to(x.reshape(m, cin), (mp, cp))
        scs = jnp.ones((1, cp), jnp.float32)
        shs = jnp.zeros((1, cp), jnp.float32)

    # BN2 + (normalized) residual add + ReLU, fused in a single sweep
    out = bn_add_relu(z2, sc2, sh2, zsc, scs, shs, tm)
    out = out[:m, :cout].reshape(n, ho, wo, cout)
    return jnp.transpose(out, (0, 3, 1, 2))                       # NHWC -> NCHW


# ----------------------------- pure-JAX reference --------------------------- #
def _ref_conv(x_nhwc, w_torch, b, stride, padding):
    w = jnp.transpose(w_torch, (2, 3, 1, 0))                      # HWIO
    y = lax.conv_general_dilated(
        x_nhwc, w, (stride, stride),
        ((padding, padding), (padding, padding)),
        dimension_numbers=("NHWC", "HWIO", "NHWC"))
    return y + b


def _ref_bn(y, g, be):
    mean = jnp.mean(y, axis=(0, 1, 2), keepdims=True)
    var = jnp.mean((y - mean) ** 2, axis=(0, 1, 2), keepdims=True)
    return (y - mean) * (g * lax.rsqrt(var + EPS)) + be


def _ref_forward(x_nchw, p, stride):
    x = jnp.transpose(x_nchw, (0, 2, 3, 1))
    cin, cout = x.shape[-1], p["w1"].shape[0]
    y = jnp.maximum(_ref_bn(_ref_conv(x, p["w1"], p["b1"], stride, 1),
                            p["g1"], p["be1"]), 0.0)
    if stride != 1 or cin != cout:
        sc = _ref_bn(_ref_conv(x, p["wsc"], p["bsc"], stride, 0),
                     p["gsc"], p["besc"])
    else:
        sc = x
    y = _ref_bn(_ref_conv(y, p["w2"], p["b2"], 1, 1), p["g2"], p["be2"]) + sc
    y = jnp.maximum(y, 0.0)
    return jnp.transpose(y, (0, 3, 1, 2))


# ----------------------------------- main ----------------------------------- #
if __name__ == "__main__":
    key = jax.random.PRNGKey(0)
    k_x, k_p = jax.random.split(key)
    N, Cin, H, W = 2, 4, 16, 16
    Cout, stride = 8, 2

    x = jax.random.normal(k_x, (N, Cin, H, W), jnp.float32)
    params = init_basic_block(k_p, Cin, Cout, stride)

    out = basic_block_forward(x, params, stride)
    out = jax.block_until_ready(out)

    ref = _ref_forward(x, params, stride)
    assert out.shape == (N, Cout, H // stride, W // stride), out.shape
    assert jnp.allclose(out, ref, atol=1e-3, rtol=1e-3), \
        float(jnp.max(jnp.abs(out - ref)))
    print("KERNEL_OK")
</pallas_src>

<mosaic_0001>
module attributes {stable_mosaic.version = 11 : i64} {
  func.func @_conv_stats_kernel(%arg0: i32, %arg1: memref<128x128xf32, #tpu.memory_space<vmem>>, %arg2: memref<128x128xf32, #tpu.memory_space<vmem>>, %arg3: memref<128x128xf32, #tpu.memory_space<vmem>>, %arg4: memref<1x8x128xf32, #tpu.memory_space<vmem>>, %arg5: memref<1x8x128xf32, #tpu.memory_space<vmem>>) attributes {dimension_semantics = [#tpu.dimension_semantics<parallel>], iteration_bounds = array<i64: 1>, scalar_prefetch = 0 : i64, scratch_operands = 0 : i64, tpu.core_type = #tpu.core_type<tc>, window_params = [{transform_indices = @transform_0, window_bounds = array<i64: 128, 128>}, {pipeline_mode = #tpu.pipeline_mode<synchronous>, transform_indices = @transform_1, window_bounds = array<i64: 128, 128>}, {transform_indices = @transform_2, window_bounds = array<i64: 128, 128>}, {transform_indices = @transform_3, window_bounds = array<i64: 1, 8, 128>}, {transform_indices = @transform_4, window_bounds = array<i64: 1, 8, 128>}]} {
    %c0 = arith.constant 0 : index
    %c0_0 = arith.constant 0 : index
    %0 = vector.load %arg1[%c0, %c0_0] : memref<128x128xf32, #tpu.memory_space<vmem>>, vector<128x128xf32>
    %c0_1 = arith.constant 0 : index
    %c0_2 = arith.constant 0 : index
    %1 = vector.load %arg2[%c0_1, %c0_2] : memref<128x128xf32, #tpu.memory_space<vmem>>, vector<128x128xf32>
    %cst = arith.constant dense<0.000000e+00> : vector<128x128xf32>
    %2 = tpu.matmul %0, %1, %cst {dimension_numbers = #tpu.dot_dimension_numbers<[1], [0], [0], [1], [0, 0, 1, 1], [], []>} : vector<128x128xf32>, vector<128x128xf32>, vector<128x128xf32> -> vector<128x128xf32>
    %c0_3 = arith.constant 0 : index
    %c0_4 = arith.constant 0 : index
    %3 = vector.load %arg3[%c0_3, %c0_4] : memref<128x128xf32, #tpu.memory_space<vmem>>, vector<128x128xf32>
    tpu.vector_store %arg3[%c0_3, %c0_4], %2 {strides = array<i32>} : memref<128x128xf32, #tpu.memory_space<vmem>>, vector<128x128xf32>,
    %4 = vector.shape_cast %2 : vector<128x128xf32> to vector<16x8x128xf32>
    %cst_5 = arith.constant dense<0.000000e+00> : vector<8x128xf32>
    %5 = vector.multi_reduction <add>, %4, %cst_5 [0] : vector<16x8x128xf32> to vector<8x128xf32>
    %c0_6 = arith.constant 0 : index
    %c0_7 = arith.constant 0 : index
    %c0_8 = arith.constant 0 : index
    %6 = vector.load %arg4[%c0_6, %c0_7, %c0_8] : memref<1x8x128xf32, #tpu.memory_space<vmem>>, vector<1x8x128xf32>
    %7 = vector.shape_cast %6 : vector<1x8x128xf32> to vector<8x128xf32>
    %8 = vector.shape_cast %5 : vector<8x128xf32> to vector<1x8x128xf32>
    tpu.vector_store %arg4[%c0_6, %c0_7, %c0_8], %8 {strides = array<i32>} : memref<1x8x128xf32, #tpu.memory_space<vmem>>, vector<1x8x128xf32>,
    %9 = arith.mulf %4, %4 : vector<16x8x128xf32>
    %cst_9 = arith.constant dense<0.000000e+00> : vector<8x128xf32>
    %10 = vector.multi_reduction <add>, %9, %cst_9 [0] : vector<16x8x128xf32> to vector<8x128xf32>
    %c0_10 = arith.constant 0 : index
    %c0_11 = arith.constant 0 : index
    %c0_12 = arith.constant 0 : index
    %11 = vector.load %arg5[%c0_10, %c0_11, %c0_12] : memref<1x8x128xf32, #tpu.memory_space<vmem>>, vector<1x8x128xf32>
    %12 = vector.shape_cast %11 : vector<1x8x128xf32> to vector<8x128xf32>
    %13 = vector.shape_cast %10 : vector<8x128xf32> to vector<1x8x128xf32>
    tpu.vector_store %arg5[%c0_10, %c0_11, %c0_12], %13 {strides = array<i32>} : memref<1x8x128xf32, #tpu.memory_space<vmem>>, vector<1x8x128xf32>,
    return
  }
  func.func @transform_0(%arg0: i32) -> (i32, i32) {
    %c0_i32 = arith.constant 0 : i32
    %c0_i32_0 = arith.constant 0 : i32
    return %arg0, %c0_i32 : i32, i32
  }
  func.func @transform_1(%arg0: i32) -> (i32, i32) {
    %c0_i32 = arith.constant 0 : i32
    %c0_i32_0 = arith.constant 0 : i32
    %c0_i32_1 = arith.constant 0 : i32
    return %c0_i32, %c0_i32_0 : i32, i32
  }
  func.func @transform_2(%arg0: i32) -> (i32, i32) {
    %c0_i32 = arith.constant 0 : i32
    %c0_i32_0 = arith.constant 0 : i32
    return %arg0, %c0_i32 : i32, i32
  }
  func.func @transform_3(%arg0: i32) -> (i32, i32, i32) {
    %c0_i32 = arith.constant 0 : i32
    %c0_i32_0 = arith.constant 0 : i32
    %c0_i32_1 = arith.constant 0 : i32
    return %arg0, %c0_i32, %c0_i32_0 : i32, i32, i32
  }
  func.func @transform_4(%arg0: i32) -> (i32, i32, i32) {
    %c0_i32 = arith.constant 0 : i32
    %c0_i32_0 = arith.constant 0 : i32
    %c0_i32_1 = arith.constant 0 : i32
    return %arg0, %c0_i32, %c0_i32_0 : i32, i32, i32
  }
}

</mosaic_0001>

<llo_original>
// kernel: tpu_custom_call.1
$region0: #{tpu_custom_call.1}
  #allocation0 [shape = 'u32[]', space=smem, size = 0x4, offset = 0x4, fixed_abs, tag = 'smem constant byte address 0x4 - core index']
  #allocation1 [shape = 'u32[72,128]{1,0:T(1,128)}', space=vmem, size = 0x9000, scoped, tag = 'internal scratch']
  %s0 = inlined_call_operand.hbm [shape: f32[128,128], index: 0, kind: input, shape index: {}]
  %s1 = inlined_call_operand.hbm [shape: f32[128,128], index: 1, kind: input, shape index: {}]
  %s2 = inlined_call_operand.hbm [shape: f32[128,128], index: 2, kind: output, shape index: {0}]
  %s3 = inlined_call_operand.hbm [shape: f32[1,8,128], index: 3, kind: output, shape index: {1}]
  %s4 = inlined_call_operand.hbm [shape: f32[1,8,128], index: 4, kind: output, shape index: {2}]
  %5 = xla_tuple %s2, %s3, %s4
  %s6 = sld [smem:[#allocation0]]
  $region42: #{tpu_custom_call.1} parent=0
    _
  %s8 = ssub.s32 1, %s6
  %s9 = scalar_select 0, %s8, %s6
  $region1: #{tpu_custom_call.1} parent=0
    #allocation2 [shape = 'u8[65536]{0}', space=vmem, size = 0x10000, scoped, tag = 'input window, operand 0, single buffered']
    #allocation3 [shape = 's32[1]{0}', space=sflag, size = 0x4, scoped, tag = 'scoped memory for tpu_custom_call.1']
    #allocation4 [shape = 's32[1]{0}', space=sflag, size = 0x4, scoped, tag = 'scoped memory for tpu_custom_call.1']
    #allocation5 [shape = 'u8[65536]{0}', space=vmem, size = 0x10000, scoped, tag = 'input window, operand 1, single buffered']
    #allocation6 [shape = 's32[1]{0}', space=sflag, size = 0x4, scoped, tag = 'scoped memory for tpu_custom_call.1']
    #allocation7 [shape = 'u8[65536]{0}', space=vmem, size = 0x10000, scoped, tag = 'output window, operand 0, single buffered']
    #allocation8 [shape = 'u8[4096]{0}', space=vmem, size = 0x1000, scoped, tag = 'output window, operand 1, single buffered']
    #allocation9 [shape = 's32[1]{0}', space=sflag, size = 0x4, scoped, tag = 'scoped memory for tpu_custom_call.1']
    #allocation10 [shape = 'u8[4096]{0}', space=vmem, size = 0x1000, scoped, tag = 'output window, operand 2, single buffered']
    %10 = vsyncpa [#allocation3], 0
    %11 = vsyncpa [#allocation6], 0
    %12 = vsyncpa [#allocation4], 0
    %13 = vsyncpa [#allocation9], 0
    // Predicated region
    $region2: #{tpu_custom_call.1} parent=1 // pred_check
      _
    $region3: #{tpu_custom_call.1} parent=1 // pred_check_branch
      %15 = sbr.rel (0) target = $region5
    $region4: #{tpu_custom_call.1} parent=1 // pred_region
      %17 = vsyncadd [#allocation3], 0
      %s18 = sshll.u32 %s0, 4
      %s19 = int_to_ptr.hbm [resolvable:$true] %s18
      %s20 = sshll.u32 [#allocation2], 4
      %s21 = int_to_ptr.vmem [resolvable:$true] %s20
      %26 = dma.hbm_to_vmem [thread:$0]  %s19, 2048, %s21, [#allocation3], 128, 128, 8
    $region5: #{tpu_custom_call.1} parent=1 // pred_fallthru
      _
    // Predicated region
    $region6: #{tpu_custom_call.1} parent=1 // pred_check
      _
    $region7: #{tpu_custom_call.1} parent=1 // pred_check_branch
      %28 = sbr.rel (0) target = $region9
    $region8: #{tpu_custom_call.1} parent=1 // pred_region
      %30 = vsyncadd [#allocation6], 0
      %s31 = sshll.u32 %s1, 4
      %s32 = int_to_ptr.hbm [resolvable:$true] %s31
      %s33 = sshll.u32 [#allocation5], 4
      %s34 = int_to_ptr.vmem [resolvable:$true] %s33
      %39 = dma.hbm_to_vmem [thread:$0]  %s32, 2048, %s34, [#allocation6], 128, 128, 8
    $region9: #{tpu_custom_call.1} parent=1 // pred_fallthru
      _
    // Predicated region
    $region10: #{tpu_custom_call.1} parent=1 // pred_check
      _
    $region11: #{tpu_custom_call.1} parent=1 // pred_check_branch
      %41 = sbr.rel (0) target = $region13
    $region12: #{tpu_custom_call.1} parent=1 // pred_region
      %43 = dma.done [#allocation3], 2048
    $region13: #{tpu_custom_call.1} parent=1 // pred_fallthru
      _
    // Predicated region
    $region14: #{tpu_custom_call.1} parent=1 // pred_check
      _
    $region15: #{tpu_custom_call.1} parent=1 // pred_check_branch
      %45 = sbr.rel (0) target = $region17
    $region16: #{tpu_custom_call.1} parent=1 // pred_region
      %47 = dma.done [#allocation6], 2048
    $region17: #{tpu_custom_call.1} parent=1 // pred_fallthru
      _
    %v48 = vld [vmem:[#allocation2] sm:$0xff]
    %v49 = vld [vmem:[#allocation2 + $0x8] sm:$0xff]
    %v50 = vld [vmem:[#allocation2 + $0x10] sm:$0xff]
    %v51 = vld [vmem:[#allocation2 + $0x18] sm:$0xff]
    %v52 = vld [vmem:[#allocation2 + $0x20] sm:$0xff]
    %v53 = vld [vmem:[#allocation2 + $0x28] sm:$0xff]
    %v54 = vld [vmem:[#allocation2 + $0x30] sm:$0xff]
    %v55 = vld [vmem:[#allocation2 + $0x38] sm:$0xff]
    %v56 = vld [vmem:[#allocation2 + $0x40] sm:$0xff]
    %v57 = vld [vmem:[#allocation2 + $0x48] sm:$0xff]
    %v58 = vld [vmem:[#allocation2 + $0x50] sm:$0xff]
    %v59 = vld [vmem:[#allocation2 + $0x58] sm:$0xff]
    %v60 = vld [vmem:[#allocation2 + $0x60] sm:$0xff]
    %v61 = vld [vmem:[#allocation2 + $0x68] sm:$0xff]
    %v62 = vld [vmem:[#allocation2 + $0x70] sm:$0xff]
    %v63 = vld [vmem:[#allocation2 + $0x78] sm:$0xff]
    %v64 = vld [vmem:[#allocation5] sm:$0xff]
    %v65 = vld [vmem:[#allocation5 + $0x8] sm:$0xff]
    %v66 = vld [vmem:[#allocation5 + $0x10] sm:$0xff]
    %v67 = vld [vmem:[#allocation5 + $0x18] sm:$0xff]
    %v68 = vld [vmem:[#allocation5 + $0x20] sm:$0xff]
    %v69 = vld [vmem:[#allocation5 + $0x28] sm:$0xff]
    %v70 = vld [vmem:[#allocation5 + $0x30] sm:$0xff]
    %v71 = vld [vmem:[#allocation5 + $0x38] sm:$0xff]
    %v72 = vld [vmem:[#allocation5 + $0x40] sm:$0xff]
    %v73 = vld [vmem:[#allocation5 + $0x48] sm:$0xff]
    %v74 = vld [vmem:[#allocation5 + $0x50] sm:$0xff]
    %v75 = vld [vmem:[#allocation5 + $0x58] sm:$0xff]
    %v76 = vld [vmem:[#allocation5 + $0x60] sm:$0xff]
    %v77 = vld [vmem:[#allocation5 + $0x68] sm:$0xff]
    %v78 = vld [vmem:[#allocation5 + $0x70] sm:$0xff]
    %v79 = vld [vmem:[#allocation5 + $0x78] sm:$0xff]
    %80 = vmatpush.msra.mxu0 %v79
    %81 = vmatpush.msra.mxu0 %v78
    %82 = vmatpush.msra.mxu0 %v77
    %83 = vmatpush.msra.mxu0 %v76
    %84 = vmatpush.msra.mxu0 %v75
    %85 = vmatpush.msra.mxu0 %v74
    %86 = vmatpush.msra.mxu0 %v73
    %87 = vmatpush.msra.mxu0 %v72
    %88 = vmatpush.msra.mxu0 %v71
    %89 = vmatpush.msra.mxu0 %v70
    %90 = vmatpush.msra.mxu0 %v69
    %91 = vmatpush.msra.mxu0 %v68
    %92 = vmatpush.msra.mxu0 %v67
    %93 = vmatpush.msra.mxu0 %v66
    %94 = vmatpush.msra.mxu0 %v65
    %95 = vmatpush.msra.mxu0 %v64
    %96 = vmatmul.f32.gmra.mxu0 %v48
    %v97 = vpop.f32.mrf.mxu0
    %v98 = vadd.f32 0.0, %v97
    %99 = vmatmul.f32.gmra.mxu0 %v49
    %v100 = vpop.f32.mrf.mxu0
    %v101 = vadd.f32 0.0, %v100
    %102 = vmatmul.f32.gmra.mxu0 %v50
    %v103 = vpop.f32.mrf.mxu0
    %v104 = vadd.f32 0.0, %v103
    %105 = vmatmul.f32.gmra.mxu0 %v51
    %v106 = vpop.f32.mrf.mxu0
    %v107 = vadd.f32 0.0, %v106
    %108 = vmatmul.f32.gmra.mxu0 %v52
    %v109 = vpop.f32.mrf.mxu0
    %v110 = vadd.f32 0.0, %v109
    %111 = vmatmul.f32.gmra.mxu0 %v53
    %v112 = vpop.f32.mrf.mxu0
    %v113 = vadd.f32 0.0, %v112
    %114 = vmatmul.f32.gmra.mxu0 %v54
    %v115 = vpop.f32.mrf.mxu0
    %v116 = vadd.f32 0.0, %v115
    %117 = vmatmul.f32.gmra.mxu0 %v55
    %v118 = vpop.f32.mrf.mxu0
    %v119 = vadd.f32 0.0, %v118
    %120 = vmatmul.f32.gmra.mxu0 %v56
    %v121 = vpop.f32.mrf.mxu0
    %v122 = vadd.f32 0.0, %v121
    %123 = vmatmul.f32.gmra.mxu0 %v57
    %v124 = vpop.f32.mrf.mxu0
    %v125 = vadd.f32 0.0, %v124
    %126 = vmatmul.f32.gmra.mxu0 %v58
    %v127 = vpop.f32.mrf.mxu0
    %v128 = vadd.f32 0.0, %v127
    %129 = vmatmul.f32.gmra.mxu0 %v59
    %v130 = vpop.f32.mrf.mxu0
    %v131 = vadd.f32 0.0, %v130
    %132 = vmatmul.f32.gmra.mxu0 %v60
    %v133 = vpop.f32.mrf.mxu0
    %v134 = vadd.f32 0.0, %v133
    %135 = vmatmul.f32.gmra.mxu0 %v61
    %v136 = vpop.f32.mrf.mxu0
    %v137 = vadd.f32 0.0, %v136
    %138 = vmatmul.f32.gmra.mxu0 %v62
    %v139 = vpop.f32.mrf.mxu0
    %v140 = vadd.f32 0.0, %v139
    %141 = vmatmul.f32.gmra.mxu0 %v63
    %v142 = vpop.f32.mrf.mxu0
    %v143 = vadd.f32 0.0, %v142
    %144 = vdwg.mxu0
    %145 = vst [vmem:[#allocation7] sm:$0xff] %v98
    %146 = vst [vmem:[#allocation7 + $0x8] sm:$0xff] %v101
    %147 = vst [vmem:[#allocation7 + $0x10] sm:$0xff] %v104
    %148 = vst [vmem:[#allocation7 + $0x18] sm:$0xff] %v107
    %149 = vst [vmem:[#allocation7 + $0x20] sm:$0xff] %v110
    %150 = vst [vmem:[#allocation7 + $0x28] sm:$0xff] %v113
    %151 = vst [vmem:[#allocation7 + $0x30] sm:$0xff] %v116
    %152 = vst [vmem:[#allocation7 + $0x38] sm:$0xff] %v119
    %153 = vst [vmem:[#allocation7 + $0x40] sm:$0xff] %v122
    %154 = vst [vmem:[#allocation7 + $0x48] sm:$0xff] %v125
    %155 = vst [vmem:[#allocation7 + $0x50] sm:$0xff] %v128
    %156 = vst [vmem:[#allocation7 + $0x58] sm:$0xff] %v131
    %157 = vst [vmem:[#allocation7 + $0x60] sm:$0xff] %v134
    %158 = vst [vmem:[#allocation7 + $0x68] sm:$0xff] %v137
    %159 = vst [vmem:[#allocation7 + $0x70] sm:$0xff] %v140
    %160 = vst [vmem:[#allocation7 + $0x78] sm:$0xff] %v143
    %v161 = vadd.f32 %v98, %v101
    %v162 = vadd.f32 %v161, %v104
    %v163 = vadd.f32 %v162, %v107
    %v164 = vadd.f32 %v163, %v110
    %v165 = vadd.f32 %v164, %v113
    %v166 = vadd.f32 %v165, %v116
    %v167 = vadd.f32 %v166, %v119
    %v168 = vadd.f32 %v167, %v122
    %v169 = vadd.f32 %v168, %v125
    %v170 = vadd.f32 %v169, %v128
    %v171 = vadd.f32 %v170, %v131
    %v172 = vadd.f32 %v171, %v134
    %v173 = vadd.f32 %v172, %v137
    %v174 = vadd.f32 %v173, %v140
    %v175 = vadd.f32 %v174, %v143
    %176 = vst [vmem:[#allocation8] sm:$0xff] %v175
    %v177 = vmul.f32 %v98, %v98
    %v178 = vmul.f32 %v101, %v101
    %v179 = vmul.f32 %v104, %v104
    %v180 = vmul.f32 %v107, %v107
    %v181 = vmul.f32 %v110, %v110
    %v182 = vmul.f32 %v113, %v113
    %v183 = vmul.f32 %v116, %v116
    %v184 = vmul.f32 %v119, %v119
    %v185 = vmul.f32 %v122, %v122
    %v186 = vmul.f32 %v125, %v125
    %v187 = vmul.f32 %v128, %v128
    %v188 = vmul.f32 %v131, %v131
    %v189 = vmul.f32 %v134, %v134
    %v190 = vmul.f32 %v137, %v137
    %v191 = vmul.f32 %v140, %v140
    %v192 = vmul.f32 %v143, %v143
    %v193 = vadd.f32 %v177, %v178
    %v194 = vadd.f32 %v193, %v179
    %v195 = vadd.f32 %v194, %v180
    %v196 = vadd.f32 %v195, %v181
    %v197 = vadd.f32 %v196, %v182
    %v198 = vadd.f32 %v197, %v183
    %v199 = vadd.f32 %v198, %v184
    %v200 = vadd.f32 %v199, %v185
    %v201 = vadd.f32 %v200, %v186
    %v202 = vadd.f32 %v201, %v187
    %v203 = vadd.f32 %v202, %v188
    %v204 = vadd.f32 %v203, %v189
    %v205 = vadd.f32 %v204, %v190
    %v206 = vadd.f32 %v205, %v191
    %v207 = vadd.f32 %v206, %v192
    %208 = vst [vmem:[#allocation10] sm:$0xff] %v207
    // Predicated region
    $region18: #{tpu_custom_call.1} parent=1 // pred_check
      _
    $region19: #{tpu_custom_call.1} parent=1 // pred_check_branch
      %210 = sbr.rel (0) target = $region21
    $region20: #{tpu_custom_call.1} parent=1 // pred_region
      %212 = vsyncadd [#allocation4], 0
      %s213 = sshll.u32 [#allocation7], 4
      %s214 = int_to_ptr.vmem [resolvable:$true] %s213
      %s215 = sshll.u32 %s2, 4
      %s216 = int_to_ptr.hbm [resolvable:$true] %s215
      %221 = dma.vmem_to_hbm [thread:$0]  %s214, 2048, %s216, [#allocation4], 128, 128, 8
    $region21: #{tpu_custom_call.1} parent=1 // pred_fallthru
      _
    // Predicated region
    $region22: #{tpu_custom_call.1} parent=1 // pred_check
      _
    $region23: #{tpu_custom_call.1} parent=1 // pred_check_branch
      %223 = sbr.rel (0) target = $region25
    $region24: #{tpu_custom_call.1} parent=1 // pred_region
      %225 = vsyncadd [#allocation9], 0
      %s227 = sshll.u32 [#allocation8], 4
      %s228 = int_to_ptr.vmem [resolvable:$true] %s227
      %s229 = sshll.u32 %s3, 4
      %s230 = int_to_ptr.hbm [resolvable:$true] %s229
      %232 = dma.vmem_to_hbm [thread:$0]  %s228, 128, %s230, [#allocation9]
    $region25: #{tpu_custom_call.1} parent=1 // pred_fallthru
      _
    // Predicated region
    $region26: #{tpu_custom_call.1} parent=1 // pred_check
      _
    $region27: #{tpu_custom_call.1} parent=1 // pred_check_branch
      %234 = sbr.rel (0) target = $region29
    $region28: #{tpu_custom_call.1} parent=1 // pred_region
      %236 = vsyncadd [#allocation9], 0
      %s238 = sshll.u32 [#allocation10], 4
      %s239 = int_to_ptr.vmem [resolvable:$true] %s238
      %s240 = sshll.u32 %s4, 4
      %s241 = int_to_ptr.hbm [resolvable:$true] %s240
      %243 = dma.vmem_to_hbm [thread:$0]  %s239, 128, %s241, [#allocation9]
    $region29: #{tpu_custom_call.1} parent=1 // pred_fallthru
      _
    // Predicated region
    $region30: #{tpu_custom_call.1} parent=1 // pred_check
      _
    $region31: #{tpu_custom_call.1} parent=1 // pred_check_branch
      %245 = sbr.rel (0) target = $region33
    $region32: #{tpu_custom_call.1} parent=1 // pred_region
      %247 = dma.done [#allocation4], 2048
    $region33: #{tpu_custom_call.1} parent=1 // pred_fallthru
      _
    // Predicated region
    $region34: #{tpu_custom_call.1} parent=1 // pred_check
      _
    $region35: #{tpu_custom_call.1} parent=1 // pred_check_branch
      %249 = sbr.rel (0) target = $region37
    $region36: #{tpu_custom_call.1} parent=1 // pred_region
      %251 = dma.done [#allocation9], 128
    $region37: #{tpu_custom_call.1} parent=1 // pred_fallthru
      _
    // Predicated region
    $region38: #{tpu_custom_call.1} parent=1 // pred_check
      _
    $region39: #{tpu_custom_call.1} parent=1 // pred_check_branch
      %253 = sbr.rel (0) target = $region41
    $region40: #{tpu_custom_call.1} parent=1 // pred_region
      %255 = dma.done [#allocation9], 128
    $region41: #{tpu_custom_call.1} parent=1 // pred_fallthru
      _
    %256 = vsyncpa [#allocation3], 1
    %257 = vsyncpa [#allocation6], 1
    %258 = vsyncpa [#allocation4], 1
    %259 = vsyncpa [#allocation9], 1

</llo_original>
